<compile_context>
chip_gen: v7x
topology: tpu7x:2x2x1
jax: 0.10.0
libtpu: 0.0.40
codegen_flags: <defaults>
</compile_context>

<pallas_src>
import jax
import jax.numpy as jnp
from jax import lax
from jax.experimental import pallas as pl
from jax.experimental.pallas import tpu as pltpu

LANE = 128     # lane width: last-dim padding target for lane-dense loads/stores
SUBLANE = 8    # sublane width: second-minor padding target


def _round_up(x, m):
    return (x + m - 1) // m * m


# ----------------------------- kernel math ----------------------------------
def _continuous_math(x, mask, w, b):
    """(x * (1 - mask)) @ w + b, with w pre-transposed to (Din_pad, E_pad)."""
    xd = (x * (1.0 - mask)).astype(w.dtype)                     # dropout (VPU)
    y = jnp.dot(xd, w, preferred_element_type=jnp.float32)      # MXU, native form
    return y + b


def _categorical_math(idx, mask, aux, table):
    """Mean of per-category embedding rows; dropped rows use the null token.

    idx   : (B, C) int32 raw category indices
    mask  : (B, 1) f32, 1.0 where the sample's condition is dropped
    aux   : (2, C) int32 -- row 0: table row offsets, row 1: null-token rows
    table : (R_pad, E_pad) all C tables concatenated, PRE-SCALED by 1/C
    """
    B, C = idx.shape
    rows = table.shape[0]
    dropped = mask > 0.5                                         # (B, 1) bool
    # all C target rows in one shot (hoisted index math)
    tgt = jnp.where(dropped, aux[1:2, :], idx + aux[0:1, :])     # (B, C) int32
    row_ids = lax.broadcasted_iota(jnp.int32, (B, rows), 1)
    one_hot = jnp.zeros((B, rows), table.dtype)
    # C is small & static -> unrolled; each category hits a disjoint row range,
    # so the accumulated one-hot stays exactly 0/1 (exact even in bf16).
    for c in range(C):
        one_hot = one_hot + (row_ids == tgt[:, c:c + 1]).astype(table.dtype)
    # table already carries the 1/C factor -> result is the mean.
    return jnp.dot(one_hot, table, preferred_element_type=jnp.float32)   # MXU


# ----------------------------- kernels ---------------------------------------
def _continuous_kernel(x_ref, mask_ref, w_ref, b_ref, o_ref):
    o_ref[...] = _continuous_math(x_ref[...], mask_ref[...], w_ref[...], b_ref[...])


def _categorical_kernel(idx_ref, mask_ref, aux_ref, table_ref, o_ref):
    o_ref[...] = _categorical_math(idx_ref[...], mask_ref[...],
                                   aux_ref[...], table_ref[...])


def _fused_kernel(x_ref, mask_ref, w_ref, b_ref, idx_ref, aux_ref, table_ref, o_ref):
    ec = w_ref.shape[1]          # continuous half width (128-multiple)
    ek = table_ref.shape[1]      # categorical half width (128-multiple)
    # single concatenated lane-dense output; both stores are lane-aligned.
    o_ref[:, pl.ds(0, ec)] = _continuous_math(x_ref[...], mask_ref[...],
                                              w_ref[...], b_ref[...])
    o_ref[:, pl.ds(ec, ek)] = _categorical_math(idx_ref[...], mask_ref[...],
                                                aux_ref[...], table_ref[...])


# ----------------------------- init-time param prep --------------------------
def init_continuous_params(w, b, *, dtype=jnp.float32):
    """Pad + pre-transpose torch nn.Linear params once.

    w: (E, Din) torch layout, b: (E,). Returns w as (Din_pad, E_pad) so the
    kernel matmul is MXU-native; Din is padded to a lane multiple so the x
    loads are lane-dense and the weight block is fully dense.
    Pass dtype=jnp.bfloat16 for MXU throughput at realistic sizes.
    """
    E, Din = w.shape
    E_pad = _round_up(E, LANE)
    Din_pad = _round_up(Din, LANE)
    w_t = jnp.zeros((Din_pad, E_pad), dtype).at[:Din, :E].set(w.T.astype(dtype))
    b_pad = jnp.pad(b.astype(jnp.float32), (0, E_pad - E)).reshape(1, E_pad)
    return dict(w=w_t, b=b_pad, embed_dim=E, in_dim=Din)


def init_categorical_params(tables, n_classes, *, dtype=jnp.float32):
    """Concat + pad the embedding tables once; fold the 1/C mean into them.

    tables[i]: (n_classes[i]+1, E). Also builds the (2, C) aux tensor of
    per-category row offsets / null-token rows consumed by the kernel.
    """
    E = tables[0].shape[1]
    C = len(tables)
    E_pad = _round_up(E, LANE)
    inv_c = 1.0 / C
    offsets, off, padded = [], 0, []
    for t in tables:
        offsets.append(off)
        padded.append(jnp.pad(t.astype(jnp.float32) * inv_c,
                              ((0, 0), (0, E_pad - E))).astype(dtype))
        off += t.shape[0]
    flat = jnp.concatenate(padded, axis=0)                       # (R, E_pad)
    R_pad = _round_up(flat.shape[0], SUBLANE)
    flat = jnp.pad(flat, ((0, R_pad - flat.shape[0]), (0, 0)))   # zero rows: never hit
    null_rows = [o + int(n) for o, n in zip(offsets, n_classes)]
    aux = jnp.asarray([offsets, null_rows], jnp.int32)           # (2, C)
    return dict(table=flat, aux=aux, embed_dim=E, num_cats=C)


# ----------------------------- wrappers ---------------------------------------
def _batch_layout(B, block_b):
    """Sublane-pad B; tile it with a parallel grid axis once it exceeds block_b."""
    B_pad = _round_up(B, SUBLANE)
    if B_pad > block_b:
        B_pad = _round_up(B, block_b)
        tb = block_b
    else:
        tb = B_pad
    return B_pad, tb


def _mask_f32(drop_mask, batch, batch_pad):
    if drop_mask is None:                       # eval mode: no condition dropout
        return jnp.zeros((batch_pad, 1), jnp.float32)
    m = drop_mask.astype(jnp.float32).reshape(batch, 1)
    if batch_pad != batch:
        m = jnp.pad(m, ((0, batch_pad - batch), (0, 0)))
    return m


def _pad_2d(a, rows, cols):
    r, c = a.shape
    if rows == r and cols == c:
        return a
    return jnp.pad(a, ((0, rows - r), (0, cols - c)))


_COMPILER_PARAMS = pltpu.CompilerParams(dimension_semantics=("parallel",))


def condition_embedding_continuous(c, drop_mask, params, *, block_b=256):
    """c: (B, Din) f32; drop_mask: (B,) bool or None; params from init_continuous_params."""
    B, Din = c.shape
    w, b, E = params["w"], params["b"], params["embed_dim"]
    Din_pad, E_pad = w.shape
    B_pad, tb = _batch_layout(B, block_b)
    x = _pad_2d(c.astype(jnp.float32), B_pad, Din_pad)
    mask = _mask_f32(drop_mask, B, B_pad)
    out = pl.pallas_call(
        _continuous_kernel,
        out_shape=jax.ShapeDtypeStruct((B_pad, E_pad), jnp.float32),
        grid=(B_pad // tb,),
        in_specs=[
            pl.BlockSpec((tb, Din_pad), lambda i: (i, 0)),
            pl.BlockSpec((tb, 1), lambda i: (i, 0)),
            pl.BlockSpec((Din_pad, E_pad), lambda i: (0, 0)),
            pl.BlockSpec((1, E_pad), lambda i: (0, 0)),
        ],
        out_specs=pl.BlockSpec((tb, E_pad), lambda i: (i, 0)),
        compiler_params=_COMPILER_PARAMS,
    )(x, mask, w, b)
    return out[:B, :E]


def condition_embedding_categorical(c_idx, drop_mask, params, *, block_b=256):
    """c_idx: (B, C) int; drop_mask: (B,) bool or None; params from init_categorical_params."""
    B, C = c_idx.shape
    table, aux, E = params["table"], params["aux"], params["embed_dim"]
    R_pad, E_pad = table.shape
    B_pad, tb = _batch_layout(B, block_b)
    idx = _pad_2d(c_idx.astype(jnp.int32), B_pad, C)
    mask = _mask_f32(drop_mask, B, B_pad)
    out = pl.pallas_call(
        _categorical_kernel,
        out_shape=jax.ShapeDtypeStruct((B_pad, E_pad), jnp.float32),
        grid=(B_pad // tb,),
        in_specs=[
            pl.BlockSpec((tb, C), lambda i: (i, 0)),
            pl.BlockSpec((tb, 1), lambda i: (i, 0)),
            pl.BlockSpec((2, C), lambda i: (0, 0)),
            pl.BlockSpec((R_pad, E_pad), lambda i: (0, 0)),
        ],
        out_specs=pl.BlockSpec((tb, E_pad), lambda i: (i, 0)),
        compiler_params=_COMPILER_PARAMS,
    )(idx, mask, aux, table)
    return out[:B, :E]


def condition_embedding_both(c_cont, c_idx, drop_mask, cont_params, cat_params,
                             *, block_b=256):
    """Single pallas_call emitting both mode outputs into one lane-dense slab."""
    B, Din = c_cont.shape
    C = c_idx.shape[1]
    w, b = cont_params["w"], cont_params["b"]
    Din_pad, Ec_pad = w.shape
    table, aux = cat_params["table"], cat_params["aux"]
    R_pad, Ek_pad = table.shape
    B_pad, tb = _batch_layout(B, block_b)
    x = _pad_2d(c_cont.astype(jnp.float32), B_pad, Din_pad)
    idx = _pad_2d(c_idx.astype(jnp.int32), B_pad, C)
    mask = _mask_f32(drop_mask, B, B_pad)
    out = pl.pallas_call(
        _fused_kernel,
        out_shape=jax.ShapeDtypeStruct((B_pad, Ec_pad + Ek_pad), jnp.float32),
        grid=(B_pad // tb,),
        in_specs=[
            pl.BlockSpec((tb, Din_pad), lambda i: (i, 0)),
            pl.BlockSpec((tb, 1), lambda i: (i, 0)),
            pl.BlockSpec((Din_pad, Ec_pad), lambda i: (0, 0)),
            pl.BlockSpec((1, Ec_pad), lambda i: (0, 0)),
            pl.BlockSpec((tb, C), lambda i: (i, 0)),
            pl.BlockSpec((2, C), lambda i: (0, 0)),
            pl.BlockSpec((R_pad, Ek_pad), lambda i: (0, 0)),
        ],
        out_specs=pl.BlockSpec((tb, Ec_pad + Ek_pad), lambda i: (i, 0)),
        compiler_params=_COMPILER_PARAMS,
    )(x, mask, w, b, idx, aux, table)
    return (out[:B, :cont_params["embed_dim"]],
            out[:B, Ec_pad:Ec_pad + cat_params["embed_dim"]])


# ----------------------------- demo / self-test -------------------------------
if __name__ == "__main__":
    key = jax.random.PRNGKey(0)
    k1, k2, k3, k4, k5, k6 = jax.random.split(key, 6)
    dropout_prob = 0.1

    # shapes consistent with the module: batch=2, cond_def=16, embed_dim=32
    B, Din, E = 2, 16, 32
    x = jax.random.normal(k1, (B, Din), jnp.float32)
    w = jax.random.normal(k2, (E, Din), jnp.float32) * 0.05     # nn.Linear weight (E, Din)
    bias = jax.random.normal(k3, (E,), jnp.float32) * 0.01
    drop_mask = jax.random.uniform(k4, (B,)) < dropout_prob     # training dropout mask

    n_classes = (5, 7, 3)
    tables = [jax.random.normal(jax.random.fold_in(k5, i), (n + 1, E), jnp.float32)
              for i, n in enumerate(n_classes)]
    c_idx = jnp.stack(
        [jax.random.randint(jax.random.fold_in(k6, i), (B,), 0, n)
         for i, n in enumerate(n_classes)], axis=1).astype(jnp.int32)   # (B, C)

    # init-time (once per module): pad / transpose / pre-scale parameters
    cont_p = init_continuous_params(w, bias)            # dtype=jnp.bfloat16 for perf
    cat_p = init_categorical_params(tables, n_classes)  # dtype=jnp.bfloat16 for perf

    # pure-JAX references mirroring the torch forward
    x_dropped = jnp.where(drop_mask[:, None], 0.0, x)
    ref_cont = x_dropped @ w.T + bias
    null = jnp.asarray(n_classes, jnp.int32)
    c_dropped = jnp.where(drop_mask[:, None], null[None, :], c_idx)
    ref_cat = jnp.mean(
        jnp.stack([t[c_dropped[:, i]] for i, t in enumerate(tables)], 0), 0)

    # standalone kernels (single launch each, parallel B grid when B is large)
    out_cont = condition_embedding_continuous(x, drop_mask, cont_p)
    out_cat = condition_embedding_categorical(c_idx, drop_mask, cat_p)
    jax.block_until_ready((out_cont, out_cat))
    assert jnp.allclose(out_cont, ref_cont, atol=1e-5), "continuous mismatch"
    assert jnp.allclose(out_cat, ref_cat, atol=1e-5), "categorical mismatch"

    # fused dual-output kernel (single launch, one concatenated lane-dense store)
    f_cont, f_cat = condition_embedding_both(x, c_idx, drop_mask, cont_p, cat_p)
    jax.block_until_ready((f_cont, f_cat))
    assert jnp.allclose(f_cont, ref_cont, atol=1e-5), "fused continuous mismatch"
    assert jnp.allclose(f_cat, ref_cat, atol=1e-5), "fused categorical mismatch"

    # eval-mode path (drop_mask=None) exercised for coverage
    out_eval = condition_embedding_continuous(x, None, cont_p)
    jax.block_until_ready(out_eval)
    assert jnp.allclose(out_eval, x @ w.T + bias, atol=1e-5), "eval continuous mismatch"

    print("KERNEL_OK")
</pallas_src>

<mosaic_0001>
module attributes {stable_mosaic.version = 11 : i64} {
  func.func @_continuous_kernel(%arg0: i32, %arg1: memref<8x128xf32, #tpu.memory_space<vmem>>, %arg2: memref<8x1xf32, #tpu.memory_space<vmem>>, %arg3: memref<128x128xf32, #tpu.memory_space<vmem>>, %arg4: memref<1x128xf32, #tpu.memory_space<vmem>>, %arg5: memref<8x128xf32, #tpu.memory_space<vmem>>) attributes {dimension_semantics = [#tpu.dimension_semantics<parallel>], iteration_bounds = array<i64: 1>, scalar_prefetch = 0 : i64, scratch_operands = 0 : i64, tpu.core_type = #tpu.core_type<tc>, window_params = [{transform_indices = @transform_0, window_bounds = array<i64: 8, 128>}, {transform_indices = @transform_1, window_bounds = array<i64: 8, 1>}, {pipeline_mode = #tpu.pipeline_mode<synchronous>, transform_indices = @transform_2, window_bounds = array<i64: 128, 128>}, {pipeline_mode = #tpu.pipeline_mode<synchronous>, transform_indices = @transform_3, window_bounds = array<i64: 1, 128>}, {transform_indices = @transform_4, window_bounds = array<i64: 8, 128>}]} {
    %c0 = arith.constant 0 : index
    %c0_0 = arith.constant 0 : index
    %0 = vector.load %arg1[%c0, %c0_0] : memref<8x128xf32, #tpu.memory_space<vmem>>, vector<8x128xf32>
    %c0_1 = arith.constant 0 : index
    %c0_2 = arith.constant 0 : index
    %1 = vector.load %arg2[%c0_1, %c0_2] : memref<8x1xf32, #tpu.memory_space<vmem>>, vector<8x1xf32>
    %c0_3 = arith.constant 0 : index
    %c0_4 = arith.constant 0 : index
    %2 = vector.load %arg3[%c0_3, %c0_4] : memref<128x128xf32, #tpu.memory_space<vmem>>, vector<128x128xf32>
    %c0_5 = arith.constant 0 : index
    %c0_6 = arith.constant 0 : index
    %3 = vector.load %arg4[%c0_5, %c0_6] : memref<1x128xf32, #tpu.memory_space<vmem>>, vector<1x128xf32>
    %cst = arith.constant 1.000000e+00 : f32
    %4 = vector.broadcast %cst : f32 to vector<8x1xf32>
    %5 = arith.subf %4, %1 : vector<8x1xf32>
    %6 = vector.broadcast %5 : vector<8x1xf32> to vector<8x128xf32>
    %7 = arith.mulf %0, %6 : vector<8x128xf32>
    %cst_7 = arith.constant dense<0.000000e+00> : vector<8x128xf32>
    %8 = tpu.matmul %7, %2, %cst_7 {dimension_numbers = #tpu.dot_dimension_numbers<[1], [0], [0], [1], [0, 0, 1, 1], [], []>} : vector<8x128xf32>, vector<128x128xf32>, vector<8x128xf32> -> vector<8x128xf32>
    %9 = vector.broadcast %3 : vector<1x128xf32> to vector<8x128xf32>
    %10 = arith.addf %8, %9 : vector<8x128xf32>
    %c0_8 = arith.constant 0 : index
    %c0_9 = arith.constant 0 : index
    %11 = vector.load %arg5[%c0_8, %c0_9] : memref<8x128xf32, #tpu.memory_space<vmem>>, vector<8x128xf32>
    tpu.vector_store %arg5[%c0_8, %c0_9], %10 {strides = array<i32>} : memref<8x128xf32, #tpu.memory_space<vmem>>, vector<8x128xf32>,
    return
  }
  func.func @transform_0(%arg0: i32) -> (i32, i32) {
    %c0_i32 = arith.constant 0 : i32
    %c0_i32_0 = arith.constant 0 : i32
    return %arg0, %c0_i32 : i32, i32
  }
  func.func @transform_1(%arg0: i32) -> (i32, i32) {
    %c0_i32 = arith.constant 0 : i32
    %c0_i32_0 = arith.constant 0 : i32
    return %arg0, %c0_i32 : i32, i32
  }
  func.func @transform_2(%arg0: i32) -> (i32, i32) {
    %c0_i32 = arith.constant 0 : i32
    %c0_i32_0 = arith.constant 0 : i32
    %c0_i32_1 = arith.constant 0 : i32
    return %c0_i32, %c0_i32_0 : i32, i32
  }
  func.func @transform_3(%arg0: i32) -> (i32, i32) {
    %c0_i32 = arith.constant 0 : i32
    %c0_i32_0 = arith.constant 0 : i32
    %c0_i32_1 = arith.constant 0 : i32
    return %c0_i32, %c0_i32_0 : i32, i32
  }
  func.func @transform_4(%arg0: i32) -> (i32, i32) {
    %c0_i32 = arith.constant 0 : i32
    %c0_i32_0 = arith.constant 0 : i32
    return %arg0, %c0_i32 : i32, i32
  }
}

</mosaic_0001>

<llo_original>
// kernel: tpu_custom_call.1
$region0: #{tpu_custom_call.1}
  #allocation0 [shape = 'u32[]', space=smem, size = 0x4, offset = 0x4, fixed_abs, tag = 'smem constant byte address 0x4 - core index']
  #allocation1 [shape = 'u32[144,128]{1,0:T(1,128)}', space=vmem, size = 0x12000, scoped, tag = 'internal scratch']
  %s0 = inlined_call_operand.vmem [shape: f32[8,128], index: 0, kind: input, shape index: {}]
  %s1 = inlined_call_operand.vmem [shape: f32[8,1], index: 1, kind: input, shape index: {}]
  %s2 = inlined_call_operand.hbm [shape: f32[128,128], index: 2, kind: input, shape index: {}]
  %s3 = inlined_call_operand.vmem [shape: f32[1,128], index: 3, kind: input, shape index: {}]
  %s4 = inlined_call_operand.hbm [shape: f32[8,128], index: 4, kind: output, shape index: {}]
  %s5 = sld [smem:[#allocation0]]
  $region30: #{tpu_custom_call.1} parent=0
    _
  %s7 = ssub.s32 1, %s5
  %s8 = scalar_select 0, %s7, %s5
  $region1: #{tpu_custom_call.1} parent=0
    #allocation2 [shape = 'u8[65536]{0}', space=vmem, size = 0x10000, scoped, tag = 'input window, operand 2, single buffered']
    #allocation3 [shape = 's32[1]{0}', space=sflag, size = 0x4, scoped, tag = 'scoped memory for tpu_custom_call.1']
    #allocation4 [shape = 's32[1]{0}', space=sflag, size = 0x4, scoped, tag = 'scoped memory for tpu_custom_call.1']
    #allocation5 [shape = 'u8[4096]{0}', space=vmem, size = 0x1000, scoped, tag = 'output window, operand 0, single buffered']
    %9 = vsyncpa [#allocation3], 0
    %10 = vsyncpa [#allocation4], 0
    // Predicated region
    $region2: #{tpu_custom_call.1} parent=1 // pred_check
      _
    $region3: #{tpu_custom_call.1} parent=1 // pred_check_branch
      %12 = sbr.rel (0) target = $region5
    $region4: #{tpu_custom_call.1} parent=1 // pred_region
      _
    $region5: #{tpu_custom_call.1} parent=1 // pred_fallthru
      _
    // Predicated region
    $region6: #{tpu_custom_call.1} parent=1 // pred_check
      _
    $region7: #{tpu_custom_call.1} parent=1 // pred_check_branch
      %14 = sbr.rel (0) target = $region9
    $region8: #{tpu_custom_call.1} parent=1 // pred_region
      _
    $region9: #{tpu_custom_call.1} parent=1 // pred_fallthru
      _
    // Predicated region
    $region10: #{tpu_custom_call.1} parent=1 // pred_check
      _
    $region11: #{tpu_custom_call.1} parent=1 // pred_check_branch
      %16 = sbr.rel (0) target = $region13
    $region12: #{tpu_custom_call.1} parent=1 // pred_region
      %s18 = ssub.s32 2048, 2048
      %19 = vsyncadd [#allocation3], %s18
      %s20 = sshll.u32 [#allocation2], 4
      %s21 = int_to_ptr.vmem [resolvable:$true] %s20
      %26 = dma.hbm_to_vmem [thread:$0]  %s2, 2048, %s21, [#allocation3], 128, 128, 8
    $region13: #{tpu_custom_call.1} parent=1 // pred_fallthru
      _
    // Predicated region
    $region14: #{tpu_custom_call.1} parent=1 // pred_check
      _
    $region15: #{tpu_custom_call.1} parent=1 // pred_check_branch
      %28 = sbr.rel (0) target = $region17
    $region16: #{tpu_custom_call.1} parent=1 // pred_region
      _
    $region17: #{tpu_custom_call.1} parent=1 // pred_fallthru
      _
    // Predicated region
    $region18: #{tpu_custom_call.1} parent=1 // pred_check
      _
    $region19: #{tpu_custom_call.1} parent=1 // pred_check_branch
      %30 = sbr.rel (0) target = $region21
    $region20: #{tpu_custom_call.1} parent=1 // pred_region
      %31 = dma.done [#allocation3], 2048
    $region21: #{tpu_custom_call.1} parent=1 // pred_fallthru
      _
    %v32 = vld [vmem:[%s0] sm:$0xff]
    %v33 = vld [vmem:[%s1] sm:$0xff]
    %v34 = vld [vmem:[#allocation2] sm:$0xff]
    %v35 = vld [vmem:[#allocation2 + $0x8] sm:$0xff]
    %v36 = vld [vmem:[#allocation2 + $0x10] sm:$0xff]
    %v37 = vld [vmem:[#allocation2 + $0x18] sm:$0xff]
    %v38 = vld [vmem:[#allocation2 + $0x20] sm:$0xff]
    %v39 = vld [vmem:[#allocation2 + $0x28] sm:$0xff]
    %v40 = vld [vmem:[#allocation2 + $0x30] sm:$0xff]
    %v41 = vld [vmem:[#allocation2 + $0x38] sm:$0xff]
    %v42 = vld [vmem:[#allocation2 + $0x40] sm:$0xff]
    %v43 = vld [vmem:[#allocation2 + $0x48] sm:$0xff]
    %v44 = vld [vmem:[#allocation2 + $0x50] sm:$0xff]
    %v45 = vld [vmem:[#allocation2 + $0x58] sm:$0xff]
    %v46 = vld [vmem:[#allocation2 + $0x60] sm:$0xff]
    %v47 = vld [vmem:[#allocation2 + $0x68] sm:$0xff]
    %v48 = vld [vmem:[#allocation2 + $0x70] sm:$0xff]
    %v49 = vld [vmem:[#allocation2 + $0x78] sm:$0xff]
    %v50 = vld [vmem:[%s3] sm:$0x1]
    %v51 = vsub.f32 1.0, %v33
    %53 = vset.pattern.permute.xlu0 0
    %54 = vperm.xlu0 %53, %v51
    %v55 = vpop.permute.xlu0 %54
    %v57 = vmul.f32 %v32, %v55
    %v59 = vlaneseq
    %v60 = vshrl.u32 %v59, 7
    %v61 = vsub.s32 0, %v60
    %v62 = vrot.slane %v50, %v61
    %64 = vmatprep.subr.mxu0 0.0
    %65 = vmatpush1.msra.mxu0 %v34
    %66 = vmatprep.subr.mxu0 0.0
    %67 = vmatpush1.msra.mxu0 %v35
    %68 = vmatprep.subr.mxu0 0.0
    %69 = vmatpush1.msra.mxu0 %v36
    %70 = vmatprep.subr.mxu0 0.0
    %71 = vmatpush1.msra.mxu0 %v37
    %72 = vmatprep.subr.mxu0 0.0
    %73 = vmatpush1.msra.mxu0 %v38
    %74 = vmatprep.subr.mxu0 0.0
    %75 = vmatpush1.msra.mxu0 %v39
    %76 = vmatprep.subr.mxu0 0.0
    %77 = vmatpush1.msra.mxu0 %v40
    %78 = vmatprep.subr.mxu0 0.0
    %79 = vmatpush1.msra.mxu0 %v41
    %80 = vmatprep.subr.mxu0 0.0
    %81 = vmatpush1.msra.mxu0 %v42
    %82 = vmatprep.subr.mxu0 0.0
    %83 = vmatpush1.msra.mxu0 %v43
    %84 = vmatprep.subr.mxu0 0.0
    %85 = vmatpush1.msra.mxu0 %v44
    %86 = vmatprep.subr.mxu0 0.0
    %87 = vmatpush1.msra.mxu0 %v45
    %88 = vmatprep.subr.mxu0 0.0
    %89 = vmatpush1.msra.mxu0 %v46
    %90 = vmatprep.subr.mxu0 0.0
    %91 = vmatpush1.msra.mxu0 %v47
    %92 = vmatprep.subr.mxu0 0.0
    %93 = vmatpush1.msra.mxu0 %v48
    %94 = vmatprep.subr.mxu0 0.0
    %95 = vmatpush1.msra.mxu0 %v49
    %96 = vmatprep.subr.mxu0 0.0
    %97 = vmatpush1.msra.mxu0 0.0
    %98 = vmatprep.subr.mxu0 0.0
    %99 = vmatpush1.msra.mxu0 0.0
    %100 = vmatprep.subr.mxu0 0.0
    %101 = vmatpush1.msra.mxu0 0.0
    %102 = vmatprep.subr.mxu0 0.0
    %103 = vmatpush1.msra.mxu0 0.0
    %104 = vmatprep.subr.mxu0 0.0
    %105 = vmatpush1.msra.mxu0 0.0
    %106 = vmatprep.subr.mxu0 0.0
    %107 = vmatpush1.msra.mxu0 0.0
    %108 = vmatprep.subr.mxu0 0.0
    %109 = vmatpush1.msra.mxu0 0.0
    %110 = vmatprep.subr.mxu0 0.0
    %111 = vmatpush1.msra.mxu0 0.0
    %112 = vmatprep.subr.mxu0 0.0
    %113 = vmatpush1.msra.mxu0 0.0
    %114 = vmatprep.subr.mxu0 0.0
    %115 = vmatpush1.msra.mxu0 0.0
    %116 = vmatprep.subr.mxu0 0.0
    %117 = vmatpush1.msra.mxu0 0.0
    %118 = vmatprep.subr.mxu0 0.0
    %119 = vmatpush1.msra.mxu0 0.0
    %120 = vmatprep.subr.mxu0 0.0
    %121 = vmatpush1.msra.mxu0 0.0
    %122 = vmatprep.subr.mxu0 0.0
    %123 = vmatpush1.msra.mxu0 0.0
    %124 = vmatprep.subr.mxu0 0.0
    %125 = vmatpush1.msra.mxu0 0.0
    %126 = vmatprep.subr.mxu0 0.0
    %127 = vmatpush1.msra.mxu0 0.0
    %128 = vmatprep.mubr.f32.mxu0 0.0
    %129 = vmatmul.mubr.f32.gmra.mrb[0].mxu0 %v57
    %v130 = vpop.f32.mrb[0].mxu0
    %v131 = vadd.f32 %v62, %v130
    %v132 = vpop.f32.mrb[0].mxu0
    %133 = vdwg.mxu0
    %134 = vst [vmem:[#allocation5] sm:$0xff] %v131
    // Predicated region
    $region22: #{tpu_custom_call.1} parent=1 // pred_check
      _
    $region23: #{tpu_custom_call.1} parent=1 // pred_check_branch
      %136 = sbr.rel (0) target = $region25
    $region24: #{tpu_custom_call.1} parent=1 // pred_region
      %s138 = ssub.s32 128, 128
      %139 = vsyncadd [#allocation4], %s138
      %s141 = sshll.u32 [#allocation5], 4
      %s142 = int_to_ptr.vmem [resolvable:$true] %s141
      %144 = dma.vmem_to_hbm [thread:$0]  %s142, 128, %s4, [#allocation4]
    $region25: #{tpu_custom_call.1} parent=1 // pred_fallthru
      _
    // Predicated region
    $region26: #{tpu_custom_call.1} parent=1 // pred_check
      _
    $region27: #{tpu_custom_call.1} parent=1 // pred_check_branch
      %146 = sbr.rel (0) target = $region29
    $region28: #{tpu_custom_call.1} parent=1 // pred_region
      %147 = dma.done [#allocation4], 128
    $region29: #{tpu_custom_call.1} parent=1 // pred_fallthru
      _
    %148 = vsyncpa [#allocation3], 1
    %149 = vsyncpa [#allocation4], 1

</llo_original>
